<compile_context>
chip_gen: v5e
topology: v5e:2x2
jax: 0.10.0
libtpu: 0.0.40
codegen_flags: <defaults>
</compile_context>

<pallas_src>
import jax
import jax.numpy as jnp
from jax.experimental import pallas as pl
from jax.experimental.pallas import tpu as pltpu


def _round_up(x, m):
    return (x + m - 1) // m * m


def resid_linear_kernel(x_ref, w_ref, b_ref, o_ref):
    """One (i, j, k) grid step of  y = tanh(x @ W^T + b + x).

    x_ref : (tm, tf) x tile indexed by (i, k)   -- matmul LHS (and residual
            when k == j, since tn == tk == tf over the same padded axis)
    w_ref : (tf, tf) W tile in PyTorch (out, in) layout, indexed by (j, k)
    b_ref : (1,  tf) f32 bias tile, indexed by j only
    o_ref : (tm, tf) f32 output tile indexed by (i, j); block index ignores k,
            so it stays VMEM-resident across the k axis and doubles as the
            accumulator.
    """
    j = pl.program_id(1)
    k = pl.program_id(2)
    last_k = pl.num_programs(2) - 1

    # Initialize the accumulator with the (broadcast) bias: the bias add is
    # then off the critical last-k epilogue for free.
    @pl.when(k == 0)
    def _():
        o_ref[...] = jnp.broadcast_to(b_ref[...], o_ref.shape).astype(jnp.float32)

    # Fold the residual into the accumulator exactly once, on the k step whose
    # x tile is the (i, j) residual tile (tn == tk == tf guarantees k == j
    # selects the matching feature block).
    @pl.when(k == j)
    def _():
        o_ref[...] += x_ref[...].astype(jnp.float32)

    # y[m, n] += sum_k x[m, k] * W[n, k]  -- contract against W's (in) axis
    # directly on the MXU (no weight transpose), f32 accumulation.
    o_ref[...] += jax.lax.dot_general(
        x_ref[...], w_ref[...],
        dimension_numbers=(((1,), (1,)), ((), ())),
        preferred_element_type=jnp.float32,
    )

    # Epilogue: tanh on the EUP, once per output tile.
    @pl.when(k == last_k)
    def _():
        o_ref[...] = jnp.tanh(o_ref[...])


def resid_linear(x, weight, bias, *, tm_max=256, tf_max=512, use_bf16=True):
    """y = tanh(x @ W^T + bias + x).

    x: (B, N); weight: (N, N) in PyTorch nn.Linear (out, in) layout; bias: (N,).
    The residual add requires n_in == n_out.
    """
    B, N = x.shape
    assert weight.shape == (N, N), "residual add requires n_in == n_out"
    assert bias.shape == (N,)

    tm_max = max(8, tm_max // 8 * 8)
    tf_max = max(128, tf_max // 128 * 128)

    # Feature axis: pad only to lane granularity (128); pick tf as the largest
    # 128-multiple <= tf_max that divides the padded extent (no over-padding
    # of the dominant W stream to tf multiples).
    Np = _round_up(N, 128)
    tf = 128
    for cand in range(min(tf_max, Np), 127, -128):
        if Np % cand == 0:
            tf = cand
            break

    # Batch axis: sublane granularity (8).
    tm = min(tm_max, _round_up(B, 8))
    Mp = _round_up(B, tm)

    in_dtype = jnp.bfloat16 if use_bf16 else x.dtype

    xp = x.astype(in_dtype)
    wp = weight.astype(in_dtype)
    bf = bias.astype(jnp.float32)

    # Pad only when needed (aligned shapes skip the extra HBM copies).
    if (Mp, Np) != (B, N):
        xp = jnp.zeros((Mp, Np), in_dtype).at[:B, :N].set(xp)
    if Np != N:
        wp = jnp.zeros((Np, Np), in_dtype).at[:N, :N].set(wp)
        bp = jnp.zeros((1, Np), jnp.float32).at[0, :N].set(bf)
    else:
        bp = bf.reshape(1, N)

    grid = (Mp // tm, Np // tf, Np // tf)

    out = pl.pallas_call(
        resid_linear_kernel,
        out_shape=jax.ShapeDtypeStruct((Mp, Np), jnp.float32),
        grid_spec=pltpu.PrefetchScalarGridSpec(
            num_scalar_prefetch=0,
            grid=grid,
            in_specs=[
                pl.BlockSpec((tm, tf), lambda i, j, k: (i, k)),  # x (LHS / resid)
                pl.BlockSpec((tf, tf), lambda i, j, k: (j, k)),  # W (out, in)
                pl.BlockSpec((1, tf), lambda i, j, k: (0, j)),   # bias
            ],
            out_specs=pl.BlockSpec((tm, tf), lambda i, j, k: (i, j)),
        ),
        compiler_params=pltpu.CompilerParams(
            # i/j are independent (shard across the 2 TCs on v7x); k reduces.
            dimension_semantics=("parallel", "parallel", "arbitrary"),
        ),
    )(xp, wp, bp)

    return out[:B, :N].astype(x.dtype)


def resid_linear_ref(x, weight, bias):
    # Pure-JAX reference at highest precision.
    y = jax.lax.dot_general(
        x, weight,
        dimension_numbers=(((1,), (1,)), ((), ())),
        precision=jax.lax.Precision.HIGHEST,
        preferred_element_type=jnp.float32,
    )
    return jnp.tanh(y + bias + x).astype(x.dtype)


if __name__ == "__main__":
    key = jax.random.PRNGKey(0)

    def make_case(k, B, N):
        kx, kw, kb = jax.random.split(k, 3)
        bound = 1.0 / (N ** 0.5)
        x = jax.random.normal(kx, (B, N), dtype=jnp.float32)
        w = jax.random.uniform(kw, (N, N), minval=-bound, maxval=bound,
                               dtype=jnp.float32)
        b = jax.random.uniform(kb, (N,), minval=-bound, maxval=bound,
                               dtype=jnp.float32)
        return x, w, b

    k1, k2, k3 = jax.random.split(key, 3)

    # Case 1: toy module shape (batch=8, hidden=32), full-precision f32 path.
    x, w, b = make_case(k1, 8, 32)
    out = jax.block_until_ready(resid_linear(x, w, b, use_bf16=False))
    ref = resid_linear_ref(x, w, b)
    assert out.shape == x.shape and out.dtype == x.dtype
    assert jnp.allclose(out, ref, atol=1e-4, rtol=1e-4), "case 1 mismatch"

    # Case 2: non-aligned shape (batch=20, hidden=300) -> pads features to 384
    # (not 512), bf16 MXU path with f32 accumulation.
    x, w, b = make_case(k2, 20, 300)
    out = jax.block_until_ready(resid_linear(x, w, b, use_bf16=True))
    ref = resid_linear_ref(x, w, b)
    assert out.shape == x.shape and out.dtype == x.dtype
    assert jnp.allclose(out, ref, atol=5e-2, rtol=5e-2), "case 2 mismatch"

    # Case 3: aligned shape (batch=128, hidden=1024) -> no padding copies,
    # tf=512, 2x2 feature grid: exercises the k-accumulation in o_ref, the
    # bias init per j tile, and the k==j residual fold off the diagonal start.
    x, w, b = make_case(k3, 128, 1024)
    out = jax.block_until_ready(resid_linear(x, w, b, use_bf16=True))
    ref = resid_linear_ref(x, w, b)
    assert out.shape == x.shape and out.dtype == x.dtype
    assert jnp.allclose(out, ref, atol=5e-2, rtol=5e-2), "case 3 mismatch"

    print("KERNEL_OK")
</pallas_src>

<mosaic_0001>
module attributes {stable_mosaic.version = 11 : i64} {
  func.func @resid_linear_kernel(%arg0: i32, %arg1: i32, %arg2: i32, %arg3: memref<8x128xf32, #tpu.memory_space<vmem>>, %arg4: memref<128x128xf32, #tpu.memory_space<vmem>>, %arg5: memref<1x128xf32, #tpu.memory_space<vmem>>, %arg6: memref<8x128xf32, #tpu.memory_space<vmem>>) attributes {dimension_semantics = [#tpu.dimension_semantics<parallel>, #tpu.dimension_semantics<parallel>, #tpu.dimension_semantics<arbitrary>], iteration_bounds = array<i64: 1, 1, 1>, scalar_prefetch = 0 : i64, scratch_operands = 0 : i64, tpu.core_type = #tpu.core_type<tc>, window_params = [{transform_indices = @transform_0, window_bounds = array<i64: 8, 128>}, {transform_indices = @transform_1, window_bounds = array<i64: 128, 128>}, {transform_indices = @transform_2, window_bounds = array<i64: 1, 128>}, {transform_indices = @transform_3, window_bounds = array<i64: 8, 128>}]} {
    %c0_i32 = arith.constant 0 : i32
    %0 = arith.cmpi eq, %arg2, %c0_i32 : i32
    %1 = arith.extui %0 : i1 to i32
    %c0_i32_0 = arith.constant 0 : i32
    %2 = arith.cmpi ne, %1, %c0_i32_0 : i32
    scf.if %2 {
      %c0_11 = arith.constant 0 : index
      %c0_12 = arith.constant 0 : index
      %15 = vector.load %arg5[%c0_11, %c0_12] : memref<1x128xf32, #tpu.memory_space<vmem>>, vector<1x128xf32>
      %16 = vector.shape_cast %15 : vector<1x128xf32> to vector<1x128xf32>
      %17 = vector.broadcast %16 : vector<1x128xf32> to vector<8x128xf32>
      %c0_13 = arith.constant 0 : index
      %c0_14 = arith.constant 0 : index
      %18 = vector.load %arg6[%c0_13, %c0_14] : memref<8x128xf32, #tpu.memory_space<vmem>>, vector<8x128xf32>
      tpu.vector_store %arg6[%c0_13, %c0_14], %17 {strides = array<i32>} : memref<8x128xf32, #tpu.memory_space<vmem>>, vector<8x128xf32>,
    } else {
    }
    %3 = arith.cmpi eq, %arg2, %arg1 : i32
    %4 = arith.extui %3 : i1 to i32
    %c0_i32_1 = arith.constant 0 : i32
    %5 = arith.cmpi ne, %4, %c0_i32_1 : i32
    scf.if %5 {
      %c0_11 = arith.constant 0 : index
      %c0_12 = arith.constant 0 : index
      %15 = vector.load %arg6[%c0_11, %c0_12] : memref<8x128xf32, #tpu.memory_space<vmem>>, vector<8x128xf32>
      %c0_13 = arith.constant 0 : index
      %c0_14 = arith.constant 0 : index
      %16 = vector.load %arg3[%c0_13, %c0_14] : memref<8x128xf32, #tpu.memory_space<vmem>>, vector<8x128xf32>
      %17 = arith.addf %15, %16 : vector<8x128xf32>
      %c0_15 = arith.constant 0 : index
      %c0_16 = arith.constant 0 : index
      %18 = vector.load %arg6[%c0_15, %c0_16] : memref<8x128xf32, #tpu.memory_space<vmem>>, vector<8x128xf32>
      tpu.vector_store %arg6[%c0_15, %c0_16], %17 {strides = array<i32>} : memref<8x128xf32, #tpu.memory_space<vmem>>, vector<8x128xf32>,
    } else {
    }
    %c0 = arith.constant 0 : index
    %c0_2 = arith.constant 0 : index
    %6 = vector.load %arg6[%c0, %c0_2] : memref<8x128xf32, #tpu.memory_space<vmem>>, vector<8x128xf32>
    %c0_3 = arith.constant 0 : index
    %c0_4 = arith.constant 0 : index
    %7 = vector.load %arg3[%c0_3, %c0_4] : memref<8x128xf32, #tpu.memory_space<vmem>>, vector<8x128xf32>
    %c0_5 = arith.constant 0 : index
    %c0_6 = arith.constant 0 : index
    %8 = vector.load %arg4[%c0_5, %c0_6] : memref<128x128xf32, #tpu.memory_space<vmem>>, vector<128x128xf32>
    %cst = arith.constant dense<0.000000e+00> : vector<8x128xf32>
    %9 = tpu.matmul %7, %8, %cst {dimension_numbers = #tpu.dot_dimension_numbers<[1], [1], [0], [0], [0, 0, 1, 0], [], []>} : vector<8x128xf32>, vector<128x128xf32>, vector<8x128xf32> -> vector<8x128xf32>
    %10 = arith.addf %6, %9 : vector<8x128xf32>
    %c0_7 = arith.constant 0 : index
    %c0_8 = arith.constant 0 : index
    %11 = vector.load %arg6[%c0_7, %c0_8] : memref<8x128xf32, #tpu.memory_space<vmem>>, vector<8x128xf32>
    tpu.vector_store %arg6[%c0_7, %c0_8], %10 {strides = array<i32>} : memref<8x128xf32, #tpu.memory_space<vmem>>, vector<8x128xf32>,
    %c0_i32_9 = arith.constant 0 : i32
    %12 = arith.cmpi eq, %arg2, %c0_i32_9 : i32
    %13 = arith.extui %12 : i1 to i32
    %c0_i32_10 = arith.constant 0 : i32
    %14 = arith.cmpi ne, %13, %c0_i32_10 : i32
    scf.if %14 {
      %c0_11 = arith.constant 0 : index
      %c0_12 = arith.constant 0 : index
      %15 = vector.load %arg6[%c0_11, %c0_12] : memref<8x128xf32, #tpu.memory_space<vmem>>, vector<8x128xf32>
      %16 = math.tanh %15 : vector<8x128xf32>
      %c0_13 = arith.constant 0 : index
      %c0_14 = arith.constant 0 : index
      %17 = vector.load %arg6[%c0_13, %c0_14] : memref<8x128xf32, #tpu.memory_space<vmem>>, vector<8x128xf32>
      tpu.vector_store %arg6[%c0_13, %c0_14], %16 {strides = array<i32>} : memref<8x128xf32, #tpu.memory_space<vmem>>, vector<8x128xf32>,
    } else {
    }
    return
  }
  func.func @transform_0(%arg0: i32, %arg1: i32, %arg2: i32) -> (i32, i32) {
    %c0_i32 = arith.constant 0 : i32
    return %arg0, %arg2 : i32, i32
  }
  func.func @transform_1(%arg0: i32, %arg1: i32, %arg2: i32) -> (i32, i32) {
    %c0_i32 = arith.constant 0 : i32
    return %arg1, %arg2 : i32, i32
  }
  func.func @transform_2(%arg0: i32, %arg1: i32, %arg2: i32) -> (i32, i32) {
    %c0_i32 = arith.constant 0 : i32
    %c0_i32_0 = arith.constant 0 : i32
    return %c0_i32, %arg1 : i32, i32
  }
  func.func @transform_3(%arg0: i32, %arg1: i32, %arg2: i32) -> (i32, i32) {
    %c0_i32 = arith.constant 0 : i32
    return %arg0, %arg1 : i32, i32
  }
}

</mosaic_0001>

<llo_original>
// kernel: tpu_custom_call.1
$region0: #{tpu_custom_call.1}
  #allocation0 [shape = 'u32[]', space=smem, size = 0x4, offset = 0x4, fixed_abs, tag = 'smem constant byte address 0x4 - core index']
  #allocation1 [shape = 'u32[72,128]{1,0:T(1,128)}', space=vmem, size = 0x9000, scoped, tag = 'internal scratch']
  %s0 = inlined_call_operand.hbm [shape: f32[8,128], index: 0, kind: input, shape index: {}]
  %s1 = inlined_call_operand.hbm [shape: f32[128,128], index: 1, kind: input, shape index: {}]
  %s2 = inlined_call_operand.vmem [shape: f32[1,128], index: 2, kind: input, shape index: {}]
  %s3 = inlined_call_operand.hbm [shape: f32[8,128], index: 3, kind: output, shape index: {}]
  %s4 = sld [smem:[#allocation0]]
  $region42: #{tpu_custom_call.1} parent=0
    _
  %s6 = ssub.s32 1, %s4
  %s7 = scalar_select 0, %s6, %s4
  $region1: #{tpu_custom_call.1} parent=0
    #allocation2 [shape = 'u8[4096]{0}', space=vmem, size = 0x1000, scoped, tag = 'input window, operand 0, single buffered']
    #allocation3 [shape = 's32[1]{0}', space=sflag, size = 0x4, scoped, tag = 'scoped memory for tpu_custom_call.1']
    #allocation4 [shape = 's32[1]{0}', space=sflag, size = 0x4, scoped, tag = 'scoped memory for tpu_custom_call.1']
    #allocation5 [shape = 'u8[65536]{0}', space=vmem, size = 0x10000, scoped, tag = 'input window, operand 1, single buffered']
    #allocation6 [shape = 's32[1]{0}', space=sflag, size = 0x4, scoped, tag = 'scoped memory for tpu_custom_call.1']
    #allocation7 [shape = 'u8[4096]{0}', space=vmem, size = 0x1000, scoped, tag = 'output window, operand 0, single buffered']
    %8 = vsyncpa [#allocation3], 0
    %9 = vsyncpa [#allocation6], 0
    %10 = vsyncpa [#allocation4], 0
    // Predicated region
    $region2: #{tpu_custom_call.1} parent=1 // pred_check
      _
    $region3: #{tpu_custom_call.1} parent=1 // pred_check_branch
      %12 = sbr.rel (0) target = $region5
    $region4: #{tpu_custom_call.1} parent=1 // pred_region
      %14 = vsyncadd [#allocation3], 0
      %s16 = sshll.u32 %s0, 4
      %s17 = int_to_ptr.hbm [resolvable:$true] %s16
      %s18 = sshll.u32 [#allocation2], 4
      %s19 = int_to_ptr.vmem [resolvable:$true] %s18
      %21 = dma.hbm_to_vmem [thread:$0]  %s17, 128, %s19, [#allocation3]
    $region5: #{tpu_custom_call.1} parent=1 // pred_fallthru
      _
    // Predicated region
    $region6: #{tpu_custom_call.1} parent=1 // pred_check
      _
    $region7: #{tpu_custom_call.1} parent=1 // pred_check_branch
      %23 = sbr.rel (0) target = $region9
    $region8: #{tpu_custom_call.1} parent=1 // pred_region
      %25 = vsyncadd [#allocation6], 0
      %s26 = sshll.u32 %s1, 4
      %s27 = int_to_ptr.hbm [resolvable:$true] %s26
      %s28 = sshll.u32 [#allocation5], 4
      %s29 = int_to_ptr.vmem [resolvable:$true] %s28
      %34 = dma.hbm_to_vmem [thread:$0]  %s27, 2048, %s29, [#allocation6], 128, 128, 8
    $region9: #{tpu_custom_call.1} parent=1 // pred_fallthru
      _
    // Predicated region
    $region10: #{tpu_custom_call.1} parent=1 // pred_check
      _
    $region11: #{tpu_custom_call.1} parent=1 // pred_check_branch
      %36 = sbr.rel (0) target = $region13
    $region12: #{tpu_custom_call.1} parent=1 // pred_region
      _
    $region13: #{tpu_custom_call.1} parent=1 // pred_fallthru
      _
    // Predicated region
    $region14: #{tpu_custom_call.1} parent=1 // pred_check
      _
    $region15: #{tpu_custom_call.1} parent=1 // pred_check_branch
      %38 = sbr.rel (0) target = $region17
    $region16: #{tpu_custom_call.1} parent=1 // pred_region
      %40 = dma.done [#allocation3], 128
    $region17: #{tpu_custom_call.1} parent=1 // pred_fallthru
      _
    // Predicated region
    $region18: #{tpu_custom_call.1} parent=1 // pred_check
      _
    $region19: #{tpu_custom_call.1} parent=1 // pred_check_branch
      %42 = sbr.rel (0) target = $region21
    $region20: #{tpu_custom_call.1} parent=1 // pred_region
      %44 = dma.done [#allocation6], 2048
    $region21: #{tpu_custom_call.1} parent=1 // pred_fallthru
      _
    %p45 = scmp.eq.s32.totalorder 0, 0
    // Predicated region
    $region22: #{tpu_custom_call.1} parent=1 // pred_check
      %p46 = pneg %p45
    $region23: #{tpu_custom_call.1} parent=1 // pred_check_branch
      %48 = sbr.rel (%p46) target = $region25
    $region24: #{tpu_custom_call.1} parent=1 // pred_region
      %v49 = vld [vmem:[%s2] sm:$0x1]
      %v51 = vperm.slane %v49, 0
      %53 = vst [vmem:[#allocation7] sm:$0xff] %v51
    $region25: #{tpu_custom_call.1} parent=1 // pred_fallthru
      _
    %p54 = scmp.eq.s32.totalorder 0, 0
    // Predicated region
    $region26: #{tpu_custom_call.1} parent=1 // pred_check
      %p55 = pneg %p54
    $region27: #{tpu_custom_call.1} parent=1 // pred_check_branch
      %57 = sbr.rel (%p55) target = $region29
    $region28: #{tpu_custom_call.1} parent=1 // pred_region
      %v58 = vld [vmem:[#allocation7] sm:$0xff]
      %v59 = vld [vmem:[#allocation2] sm:$0xff]
      %v60 = vadd.f32 %v58, %v59
      %61 = vst [vmem:[#allocation7] sm:$0xff] %v60
    $region29: #{tpu_custom_call.1} parent=1 // pred_fallthru
      _
    %v62 = vld [vmem:[#allocation7] sm:$0xff]
    %v63 = vld [vmem:[#allocation2] sm:$0xff]
    %v64 = vld [vmem:[#allocation5] sm:$0xff]
    %v65 = vld [vmem:[#allocation5 + $0x8] sm:$0xff]
    %v66 = vld [vmem:[#allocation5 + $0x10] sm:$0xff]
    %v67 = vld [vmem:[#allocation5 + $0x18] sm:$0xff]
    %v68 = vld [vmem:[#allocation5 + $0x20] sm:$0xff]
    %v69 = vld [vmem:[#allocation5 + $0x28] sm:$0xff]
    %v70 = vld [vmem:[#allocation5 + $0x30] sm:$0xff]
    %v71 = vld [vmem:[#allocation5 + $0x38] sm:$0xff]
    %v72 = vld [vmem:[#allocation5 + $0x40] sm:$0xff]
    %v73 = vld [vmem:[#allocation5 + $0x48] sm:$0xff]
    %v74 = vld [vmem:[#allocation5 + $0x50] sm:$0xff]
    %v75 = vld [vmem:[#allocation5 + $0x58] sm:$0xff]
    %v76 = vld [vmem:[#allocation5 + $0x60] sm:$0xff]
    %v77 = vld [vmem:[#allocation5 + $0x68] sm:$0xff]
    %v78 = vld [vmem:[#allocation5 + $0x70] sm:$0xff]
    %v79 = vld [vmem:[#allocation5 + $0x78] sm:$0xff]
    %80 = vmatpush.xpose.msra.mxu0 %v79
    %81 = vmatpush.xpose.msra.mxu0 %v78
    %82 = vmatpush.xpose.msra.mxu0 %v77
    %83 = vmatpush.xpose.msra.mxu0 %v76
    %84 = vmatpush.xpose.msra.mxu0 %v75
    %85 = vmatpush.xpose.msra.mxu0 %v74
    %86 = vmatpush.xpose.msra.mxu0 %v73
    %87 = vmatpush.xpose.msra.mxu0 %v72
    %88 = vmatpush.xpose.msra.mxu0 %v71
    %89 = vmatpush.xpose.msra.mxu0 %v70
    %90 = vmatpush.xpose.msra.mxu0 %v69
    %91 = vmatpush.xpose.msra.mxu0 %v68
    %92 = vmatpush.xpose.msra.mxu0 %v67
    %93 = vmatpush.xpose.msra.mxu0 %v66
    %94 = vmatpush.xpose.msra.mxu0 %v65
    %95 = vmatpush.xpose.msra.mxu0 %v64
    %96 = vmatmul.f32.gmra.mxu0 %v63
    %v97 = vpop.f32.mrf.mxu0
    %v98 = vadd.f32 0.0, %v97
    %99 = vdwg.mxu0
    %v100 = vadd.f32 %v62, %v98
    %101 = vst [vmem:[#allocation7] sm:$0xff] %v100
    // Predicated region
    $region30: #{tpu_custom_call.1} parent=1 // pred_check
      %p102 = pneg %p45
    $region31: #{tpu_custom_call.1} parent=1 // pred_check_branch
      %104 = sbr.rel (%p102) target = $region33
    $region32: #{tpu_custom_call.1} parent=1 // pred_region
      %v105 = vld [vmem:[#allocation7] sm:$0xff]
      %v106 = vtanh.pop %v105
      %107 = vst [vmem:[#allocation7] sm:$0xff] %v106
    $region33: #{tpu_custom_call.1} parent=1 // pred_fallthru
      _
    // Predicated region
    $region34: #{tpu_custom_call.1} parent=1 // pred_check
      _
    $region35: #{tpu_custom_call.1} parent=1 // pred_check_branch
      %109 = sbr.rel (0) target = $region37
    $region36: #{tpu_custom_call.1} parent=1 // pred_region
      %111 = vsyncadd [#allocation4], 0
      %s113 = sshll.u32 [#allocation7], 4
      %s114 = int_to_ptr.vmem [resolvable:$true] %s113
      %s115 = sshll.u32 %s3, 4
      %s116 = int_to_ptr.hbm [resolvable:$true] %s115
      %118 = dma.vmem_to_hbm [thread:$0]  %s114, 128, %s116, [#allocation4]
    $region37: #{tpu_custom_call.1} parent=1 // pred_fallthru
      _
    // Predicated region
    $region38: #{tpu_custom_call.1} parent=1 // pred_check
      _
    $region39: #{tpu_custom_call.1} parent=1 // pred_check_branch
      %120 = sbr.rel (0) target = $region41
    $region40: #{tpu_custom_call.1} parent=1 // pred_region
      %122 = dma.done [#allocation4], 128
    $region41: #{tpu_custom_call.1} parent=1 // pred_fallthru
      _
    %123 = vsyncpa [#allocation3], 1
    %124 = vsyncpa [#allocation6], 1
    %125 = vsyncpa [#allocation4], 1

</llo_original>
